<compile_context>
chip_gen: v5e
topology: v5e:2x2
jax: 0.10.0
libtpu: 0.0.40
codegen_flags: <defaults>
</compile_context>

<pallas_src>
import jax
import jax.numpy as jnp
from jax.experimental import pallas as pl
from jax.experimental.pallas import tpu as pltpu


def _round_up(v, m):
    return ((v + m - 1) // m) * m


def _vmem_budget_bytes():
    """~75% of physical per-core VMEM: 48 MiB on v7x (64 MiB), 96 MiB on v5e/v6e (128 MiB)."""
    try:
        cap = int(pltpu.get_tpu_info().vmem_capacity_bytes)
    except Exception:
        cap = 64 * 1024 * 1024  # conservative (v7x-sized) fallback
    return min((cap * 3) // 4, 100 * 1024 * 1024)


def _spec(shape, index_map, single_buffer=False):
    if single_buffer:
        # Block index is constant over the inner grid axis -> one buffer is enough.
        return pl.BlockSpec(shape, index_map, pipeline_mode=pl.Buffered(1))
    return pl.BlockSpec(shape, index_map)


# --------------------------------------------------------------------------------------
# Kernels
# --------------------------------------------------------------------------------------
def _sae_fused_kernel(x_ref, we_t_ref, be_ref, wd_t_ref, bd_ref, dec_ref, enc_ref):
    # Full weight matrices resident in VMEM; one grid axis over batch tiles.
    pre = jnp.dot(x_ref[...], we_t_ref[...], preferred_element_type=jnp.float32)
    enc = jnp.maximum(pre + be_ref[...], 0.0)                       # f32 bias + ReLU
    enc_ref[...] = enc.astype(enc_ref.dtype)
    dec = jnp.dot(enc.astype(wd_t_ref.dtype), wd_t_ref[...],
                  preferred_element_type=jnp.float32)
    dec_ref[...] = (dec + bd_ref[...]).astype(dec_ref.dtype)


def _sae_tiled_kernel(x_ref, we_t_ref, be_ref, wd_t_ref, bd_ref, dec_ref, enc_ref,
                      *scratch):
    # Grid: (batch tile, hidden chunk). Decoder K-reduction over hidden chunks.
    # If decoded is f32 we accumulate directly into the resident dec_ref (no scratch).
    acc_ref = scratch[0] if scratch else dec_ref
    hk = pl.program_id(1)

    pre = jnp.dot(x_ref[...], we_t_ref[...], preferred_element_type=jnp.float32)
    enc = jnp.maximum(pre + be_ref[...], 0.0)
    enc_ref[...] = enc.astype(enc_ref.dtype)

    contrib = jnp.dot(enc.astype(wd_t_ref.dtype), wd_t_ref[...],
                      preferred_element_type=jnp.float32)

    @pl.when(hk == 0)
    def _():
        # Initialize with the decoder bias (added exactly once) plus the first chunk.
        acc_ref[...] = (bd_ref[...] + contrib).astype(acc_ref.dtype)

    @pl.when(hk > 0)
    def _():
        acc_ref[...] = acc_ref[...] + contrib.astype(acc_ref.dtype)

    if scratch:
        @pl.when(hk == pl.num_programs(1) - 1)
        def _():
            dec_ref[...] = acc_ref[...].astype(dec_ref.dtype)


# --------------------------------------------------------------------------------------
# Hoisted parameter prep (do once, reuse across forward calls)
# --------------------------------------------------------------------------------------
def prepare_sae_params(w_enc, b_enc, w_dec, b_dec, *, compute_dtype=jnp.bfloat16):
    """w_enc: (H, I); b_enc: (H,); w_dec: (I, H); b_dec: (I,).

    Returns pre-transposed / cast / 128-padded operands. This is the expensive HBM
    pass -- keep it out of the per-forward hot path.
    """
    H, I = w_enc.shape
    cdt = jnp.dtype(compute_dtype)
    Ip, Hp = _round_up(I, 128), _round_up(H, 128)

    def _pad2(a, rows, cols):
        if a.shape == (rows, cols):
            return a
        return jnp.zeros((rows, cols), a.dtype).at[: a.shape[0], : a.shape[1]].set(a)

    we_t = _pad2(w_enc.T.astype(cdt), Ip, Hp)                        # (Ip, Hp)
    wd_t = _pad2(w_dec.T.astype(cdt), Hp, Ip)                        # (Hp, Ip)
    be = _pad2(b_enc.astype(jnp.float32).reshape(1, H), 1, Hp)       # (1, Hp) f32
    bd = _pad2(b_dec.astype(jnp.float32).reshape(1, I), 1, Ip)       # (1, Ip) f32
    return dict(we_t=we_t, wd_t=wd_t, be=be, bd=bd,
                input_size=I, hidden_size=H, compute_dtype=cdt)


# --------------------------------------------------------------------------------------
# Forward
# --------------------------------------------------------------------------------------
def sparse_autoencoder_forward(
    x, params, *, encoded_dtype=None, tb_max=None, th_max=None,
    prefer_fused=True, single_buffer_resident=True,
):
    """x: (B, I). params: output of prepare_sae_params. Returns (decoded (B,I), encoded (B,H))."""
    I, H = params["input_size"], params["hidden_size"]
    cdt = params["compute_dtype"]
    we_t, wd_t, be, bd = params["we_t"], params["wd_t"], params["be"], params["bd"]
    Ip, Hp = we_t.shape
    B = x.shape[0]
    out_dtype = x.dtype
    enc_dtype = jnp.dtype(encoded_dtype) if encoded_dtype is not None else jnp.dtype(out_dtype)

    cbytes = cdt.itemsize
    out_bytes = jnp.dtype(out_dtype).itemsize
    enc_bytes = enc_dtype.itemsize
    budget = _vmem_budget_bytes()
    fit_limit = (budget * 85) // 100

    # Per-generation default tile caps (bigger tiles on 128 MiB VMEM parts).
    if tb_max is None:
        tb_max = 512 if budget >= 72 * 1024 * 1024 else 256
    if th_max is None:
        th_max = 1024 if budget >= 72 * 1024 * 1024 else 512
    tb_max, th_max = max(int(tb_max), 8), max(int(th_max), 128)

    # --- batch tiling: guarantee >=2 tiles when possible so both v7x TCs get work ---
    TB = min(_round_up(B, 8), tb_max)
    if _round_up(B, 8) <= tb_max and B >= 16:
        TB = _round_up(-(-B // 2), 8)

    single_w = 1 if single_buffer_resident else 2

    # --- fused fast path: both weight matrices resident in VMEM ---
    def fused_bytes(tb):
        w = 2 * Ip * Hp * cbytes * single_w
        per = tb * (Ip * cbytes + Ip * out_bytes + Hp * enc_bytes) * 2
        return w + per + (Hp + Ip) * 4

    use_fused = prefer_fused and (2 * Ip * Hp * cbytes * single_w <= budget // 2)
    if use_fused:
        tb = TB
        while tb > 8 and fused_bytes(tb) > fit_limit:
            tb = max(8, _round_up(tb // 2, 8))
        if fused_bytes(tb) > fit_limit:
            use_fused = False
        else:
            TB = tb

    # --- tiled path: pick TH (must divide Hp) and TB to fit the VMEM budget ---
    TH = Hp
    use_acc = jnp.dtype(out_dtype) != jnp.float32
    if not use_fused:
        n128 = Hp // 128
        th_opts = sorted({d * 128 for d in range(1, n128 + 1)
                          if n128 % d == 0 and d * 128 <= th_max}, reverse=True)

        def tiled_bytes(tb, th):
            xb = tb * Ip * cbytes * single_w
            w = 2 * th * Ip * cbytes * 2            # both weight chunks, double-buffered
            dec = tb * Ip * out_bytes * 2
            enc = tb * th * enc_bytes * 2
            acc = tb * Ip * 4 if use_acc else 0
            return xb + w + dec + enc + acc + (2 * th + Ip) * 4

        found = False
        for th in th_opts:                          # prefer larger TH (fewer grid steps / RMW)
            tb = TB
            while True:
                if tiled_bytes(tb, th) <= fit_limit:
                    TB, TH, found = tb, th, True
                    break
                if tb <= 8:
                    break
                tb = max(8, _round_up(tb // 2, 8))
            if found:
                break
        if not found:
            TB, TH = 8, th_opts[-1]

    Bp = _round_up(B, TB)

    # --- per-call input padding only (skip the copy when already aligned) ---
    if x.shape == (Bp, Ip) and x.dtype == cdt:
        xp = x
    elif x.shape == (Bp, Ip):
        xp = x.astype(cdt)
    else:
        xp = jnp.zeros((Bp, Ip), cdt).at[:B, :I].set(x.astype(cdt))

    flops = 4 * Bp * Ip * Hp  # encoder + decoder GEMMs

    if use_fused:
        bytes_accessed = (Bp * Ip * cbytes + 2 * Ip * Hp * cbytes + (Hp + Ip) * 4
                          + Bp * Ip * out_bytes + Bp * Hp * enc_bytes)
        decoded_p, encoded_p = pl.pallas_call(
            _sae_fused_kernel,
            out_shape=(jax.ShapeDtypeStruct((Bp, Ip), out_dtype),
                       jax.ShapeDtypeStruct((Bp, Hp), enc_dtype)),
            grid_spec=pltpu.PrefetchScalarGridSpec(
                num_scalar_prefetch=0,
                grid=(Bp // TB,),
                in_specs=[
                    pl.BlockSpec((TB, Ip), lambda b: (b, 0)),                       # x tile
                    _spec((Ip, Hp), lambda b: (0, 0), single_buffer_resident),      # W_enc^T
                    _spec((1, Hp), lambda b: (0, 0), single_buffer_resident),       # b_enc
                    _spec((Hp, Ip), lambda b: (0, 0), single_buffer_resident),      # W_dec^T
                    _spec((1, Ip), lambda b: (0, 0), single_buffer_resident),       # b_dec
                ],
                out_specs=(pl.BlockSpec((TB, Ip), lambda b: (b, 0)),
                           pl.BlockSpec((TB, Hp), lambda b: (b, 0))),
            ),
            compiler_params=pltpu.CompilerParams(
                dimension_semantics=("parallel",),
                vmem_limit_bytes=budget,
            ),
            cost_estimate=pl.CostEstimate(flops=flops, transcendentals=0,
                                          bytes_accessed=bytes_accessed),
        )(xp, we_t, be, wd_t, bd)
    else:
        nb = Bp // TB
        bytes_accessed = (Bp * Ip * cbytes
                          + nb * 2 * Ip * Hp * cbytes      # weights re-streamed per batch tile
                          + (Hp + Ip) * 4
                          + Bp * Ip * out_bytes
                          + Bp * Hp * enc_bytes)
        scratch_shapes = [pltpu.VMEM((TB, Ip), jnp.float32)] if use_acc else []
        decoded_p, encoded_p = pl.pallas_call(
            _sae_tiled_kernel,
            out_shape=(jax.ShapeDtypeStruct((Bp, Ip), out_dtype),
                       jax.ShapeDtypeStruct((Bp, Hp), enc_dtype)),
            grid_spec=pltpu.PrefetchScalarGridSpec(
                num_scalar_prefetch=0,
                grid=(nb, Hp // TH),
                in_specs=[
                    _spec((TB, Ip), lambda b, h: (b, 0), single_buffer_resident),   # x (resident over h)
                    pl.BlockSpec((Ip, TH), lambda b, h: (0, h)),                    # W_enc^T chunk
                    pl.BlockSpec((1, TH), lambda b, h: (0, h)),                     # b_enc chunk
                    pl.BlockSpec((TH, Ip), lambda b, h: (h, 0)),                    # W_dec^T chunk
                    _spec((1, Ip), lambda b, h: (0, 0), single_buffer_resident),    # b_dec
                ],
                out_specs=(pl.BlockSpec((TB, Ip), lambda b, h: (b, 0)),             # decoded (resident)
                           pl.BlockSpec((TB, TH), lambda b, h: (b, h))),            # encoded chunk
                scratch_shapes=scratch_shapes,
            ),
            compiler_params=pltpu.CompilerParams(
                dimension_semantics=("parallel", "arbitrary"),
                vmem_limit_bytes=budget,
            ),
            cost_estimate=pl.CostEstimate(flops=flops, transcendentals=0,
                                          bytes_accessed=bytes_accessed),
        )(xp, we_t, be, wd_t, bd)

    return decoded_p[:B, :I], encoded_p[:B, :H]


def sparse_autoencoder_forward_raw(x, w_enc, b_enc, w_dec, b_dec, *,
                                   compute_dtype=jnp.bfloat16, **kwargs):
    """Convenience wrapper; for repeated calls, prepare params once and reuse instead."""
    params = prepare_sae_params(w_enc, b_enc, w_dec, b_dec, compute_dtype=compute_dtype)
    return sparse_autoencoder_forward(x, params, **kwargs)


def init_params(key, input_size, hidden_size):
    """Deterministic init mimicking nn.Linear (uniform +/- 1/sqrt(fan_in))."""
    k1, k2, k3, k4 = jax.random.split(key, 4)
    be_ = 1.0 / jnp.sqrt(jnp.float32(input_size))
    bd_ = 1.0 / jnp.sqrt(jnp.float32(hidden_size))
    w_enc = jax.random.uniform(k1, (hidden_size, input_size), jnp.float32, -be_, be_)
    b_enc = jax.random.uniform(k2, (hidden_size,), jnp.float32, -be_, be_)
    w_dec = jax.random.uniform(k3, (input_size, hidden_size), jnp.float32, -bd_, bd_)
    b_dec = jax.random.uniform(k4, (input_size,), jnp.float32, -bd_, bd_)
    return w_enc, b_enc, w_dec, b_dec


if __name__ == "__main__":
    # Small shapes consistent with the module (reps latent dim -> overcomplete SAE).
    batch, input_size, hidden_size = 8, 16, 32
    key = jax.random.PRNGKey(0)
    kx, kp = jax.random.split(key)
    x = jax.random.normal(kx, (batch, input_size), dtype=jnp.float32)
    w_enc, b_enc, w_dec, b_dec = init_params(kp, input_size, hidden_size)

    # Plain-JAX reference (same math as the PyTorch forward), f32-accurate matmuls.
    enc_ref = jnp.maximum(jnp.dot(x, w_enc.T, precision="highest") + b_enc, 0.0)
    dec_ref = jnp.dot(enc_ref, w_dec.T, precision="highest") + b_dec

    def _run(single_buffer):
        # (1) Default path: hoisted prep + bf16 operands, fused weights-resident kernel.
        params_bf16 = prepare_sae_params(w_enc, b_enc, w_dec, b_dec)
        dec_bf, enc_bf = sparse_autoencoder_forward(
            x, params_bf16, single_buffer_resident=single_buffer)
        dec_bf, enc_bf = jax.block_until_ready((dec_bf, enc_bf))
        assert dec_bf.shape == (batch, input_size)
        assert enc_bf.shape == (batch, hidden_size)
        assert jnp.allclose(enc_bf, enc_ref, atol=5e-2, rtol=5e-2)
        assert jnp.allclose(dec_bf, dec_ref, atol=5e-2, rtol=5e-2)

        # (2) f32-operand path (bit-faithful to the PyTorch module), fused kernel.
        params_f32 = prepare_sae_params(w_enc, b_enc, w_dec, b_dec,
                                        compute_dtype=jnp.float32)
        dec_f, enc_f = sparse_autoencoder_forward(
            x, params_f32, single_buffer_resident=single_buffer)
        dec_f, enc_f = jax.block_until_ready((dec_f, enc_f))
        assert jnp.allclose(enc_f, enc_ref, atol=1e-5, rtol=1e-5)
        assert jnp.allclose(dec_f, dec_ref, atol=1e-5, rtol=1e-5)

        # (3) Tiled (hidden K-reduction) path, forced with tiny tiles; bf16 encoded store.
        b2, i2, h2 = 24, 48, 256
        k2x, k2p = jax.random.split(jax.random.PRNGKey(1))
        x2 = jax.random.normal(k2x, (b2, i2), dtype=jnp.float32)
        p2 = init_params(k2p, i2, h2)
        e2_ref = jnp.maximum(jnp.dot(x2, p2[0].T, precision="highest") + p2[1], 0.0)
        d2_ref = jnp.dot(e2_ref, p2[2].T, precision="highest") + p2[3]
        params2 = prepare_sae_params(*p2, compute_dtype=jnp.float32)
        dec2, enc2 = sparse_autoencoder_forward(
            x2, params2, prefer_fused=False, tb_max=8, th_max=128,
            encoded_dtype=jnp.bfloat16, single_buffer_resident=single_buffer)
        dec2, enc2 = jax.block_until_ready((dec2, enc2))
        assert dec2.shape == (b2, i2) and enc2.shape == (b2, h2)
        assert enc2.dtype == jnp.bfloat16
        assert jnp.allclose(enc2.astype(jnp.float32), e2_ref, atol=5e-2, rtol=5e-2)
        assert jnp.allclose(dec2, d2_ref, atol=1e-3, rtol=1e-3)

    try:
        _run(True)
    except Exception:
        # Fallback for JAX builds where pl.Buffered(1) single-buffering is not supported.
        _run(False)

    print("KERNEL_OK")
</pallas_src>

<mosaic_0001>
module attributes {stable_mosaic.version = 11 : i64} {
  func.func @_sae_fused_kernel(%arg0: i32, %arg1: memref<8x128xbf16, #tpu.memory_space<vmem>>, %arg2: memref<128x128xbf16, #tpu.memory_space<vmem>>, %arg3: memref<1x128xf32, #tpu.memory_space<vmem>>, %arg4: memref<128x128xbf16, #tpu.memory_space<vmem>>, %arg5: memref<1x128xf32, #tpu.memory_space<vmem>>, %arg6: memref<8x128xf32, #tpu.memory_space<vmem>>, %arg7: memref<8x128xf32, #tpu.memory_space<vmem>>) attributes {dimension_semantics = [#tpu.dimension_semantics<parallel>], iteration_bounds = array<i64: 1>, scalar_prefetch = 0 : i64, scratch_operands = 0 : i64, tpu.core_type = #tpu.core_type<tc>, window_params = [{transform_indices = @transform_0, window_bounds = array<i64: 8, 128>}, {pipeline_mode = #tpu.pipeline_mode<synchronous>, transform_indices = @transform_1, window_bounds = array<i64: 128, 128>}, {pipeline_mode = #tpu.pipeline_mode<synchronous>, transform_indices = @transform_2, window_bounds = array<i64: 1, 128>}, {pipeline_mode = #tpu.pipeline_mode<synchronous>, transform_indices = @transform_3, window_bounds = array<i64: 128, 128>}, {pipeline_mode = #tpu.pipeline_mode<synchronous>, transform_indices = @transform_4, window_bounds = array<i64: 1, 128>}, {transform_indices = @transform_5, window_bounds = array<i64: 8, 128>}, {transform_indices = @transform_6, window_bounds = array<i64: 8, 128>}]} {
    %c0 = arith.constant 0 : index
    %c0_0 = arith.constant 0 : index
    %0 = vector.load %arg1[%c0, %c0_0] : memref<8x128xbf16, #tpu.memory_space<vmem>>, vector<8x128xbf16>
    %c0_1 = arith.constant 0 : index
    %c0_2 = arith.constant 0 : index
    %1 = vector.load %arg2[%c0_1, %c0_2] : memref<128x128xbf16, #tpu.memory_space<vmem>>, vector<128x128xbf16>
    %cst = arith.constant dense<0.000000e+00> : vector<8x128xf32>
    %2 = tpu.matmul %0, %1, %cst {dimension_numbers = #tpu.dot_dimension_numbers<[1], [0], [0], [1], [0, 0, 1, 1], [], []>} : vector<8x128xbf16>, vector<128x128xbf16>, vector<8x128xf32> -> vector<8x128xf32>
    %c0_3 = arith.constant 0 : index
    %c0_4 = arith.constant 0 : index
    %3 = vector.load %arg3[%c0_3, %c0_4] : memref<1x128xf32, #tpu.memory_space<vmem>>, vector<1x128xf32>
    %4 = vector.broadcast %3 : vector<1x128xf32> to vector<8x128xf32>
    %5 = arith.addf %2, %4 : vector<8x128xf32>
    %cst_5 = arith.constant 0.000000e+00 : f32
    %6 = vector.broadcast %cst_5 : f32 to vector<8x128xf32>
    %7 = arith.maximumf %5, %6 : vector<8x128xf32>
    %c0_6 = arith.constant 0 : index
    %c0_7 = arith.constant 0 : index
    %8 = vector.load %arg7[%c0_6, %c0_7] : memref<8x128xf32, #tpu.memory_space<vmem>>, vector<8x128xf32>
    tpu.vector_store %arg7[%c0_6, %c0_7], %7 {strides = array<i32>} : memref<8x128xf32, #tpu.memory_space<vmem>>, vector<8x128xf32>,
    %9 = arith.truncf %7 : vector<8x128xf32> to vector<8x128xbf16>
    %c0_8 = arith.constant 0 : index
    %c0_9 = arith.constant 0 : index
    %10 = vector.load %arg4[%c0_8, %c0_9] : memref<128x128xbf16, #tpu.memory_space<vmem>>, vector<128x128xbf16>
    %cst_10 = arith.constant dense<0.000000e+00> : vector<8x128xf32>
    %11 = tpu.matmul %9, %10, %cst_10 {dimension_numbers = #tpu.dot_dimension_numbers<[1], [0], [0], [1], [0, 0, 1, 1], [], []>} : vector<8x128xbf16>, vector<128x128xbf16>, vector<8x128xf32> -> vector<8x128xf32>
    %c0_11 = arith.constant 0 : index
    %c0_12 = arith.constant 0 : index
    %12 = vector.load %arg5[%c0_11, %c0_12] : memref<1x128xf32, #tpu.memory_space<vmem>>, vector<1x128xf32>
    %13 = vector.broadcast %12 : vector<1x128xf32> to vector<8x128xf32>
    %14 = arith.addf %11, %13 : vector<8x128xf32>
    %c0_13 = arith.constant 0 : index
    %c0_14 = arith.constant 0 : index
    %15 = vector.load %arg6[%c0_13, %c0_14] : memref<8x128xf32, #tpu.memory_space<vmem>>, vector<8x128xf32>
    tpu.vector_store %arg6[%c0_13, %c0_14], %14 {strides = array<i32>} : memref<8x128xf32, #tpu.memory_space<vmem>>, vector<8x128xf32>,
    return
  }
  func.func @transform_0(%arg0: i32) -> (i32, i32) {
    %c0_i32 = arith.constant 0 : i32
    %c0_i32_0 = arith.constant 0 : i32
    return %arg0, %c0_i32 : i32, i32
  }
  func.func @transform_1(%arg0: i32) -> (i32, i32) {
    %c0_i32 = arith.constant 0 : i32
    %c0_i32_0 = arith.constant 0 : i32
    %c0_i32_1 = arith.constant 0 : i32
    return %c0_i32, %c0_i32_0 : i32, i32
  }
  func.func @transform_2(%arg0: i32) -> (i32, i32) {
    %c0_i32 = arith.constant 0 : i32
    %c0_i32_0 = arith.constant 0 : i32
    %c0_i32_1 = arith.constant 0 : i32
    return %c0_i32, %c0_i32_0 : i32, i32
  }
  func.func @transform_3(%arg0: i32) -> (i32, i32) {
    %c0_i32 = arith.constant 0 : i32
    %c0_i32_0 = arith.constant 0 : i32
    %c0_i32_1 = arith.constant 0 : i32
    return %c0_i32, %c0_i32_0 : i32, i32
  }
  func.func @transform_4(%arg0: i32) -> (i32, i32) {
    %c0_i32 = arith.constant 0 : i32
    %c0_i32_0 = arith.constant 0 : i32
    %c0_i32_1 = arith.constant 0 : i32
    return %c0_i32, %c0_i32_0 : i32, i32
  }
  func.func @transform_5(%arg0: i32) -> (i32, i32) {
    %c0_i32 = arith.constant 0 : i32
    %c0_i32_0 = arith.constant 0 : i32
    return %arg0, %c0_i32 : i32, i32
  }
  func.func @transform_6(%arg0: i32) -> (i32, i32) {
    %c0_i32 = arith.constant 0 : i32
    %c0_i32_0 = arith.constant 0 : i32
    return %arg0, %c0_i32 : i32, i32
  }
}

module attributes {stable_mosaic.version = 11 : i64} {
  func.func @_sae_fused_kernel(%arg0: i32, %arg1: memref<8x128xbf16, #tpu.memory_space<vmem>>, %arg2: memref<128x128xbf16, #tpu.memory_space<vmem>>, %arg3: memref<1x128xf32, #tpu.memory_space<vmem>>, %arg4: memref<128x128xbf16, #tpu.memory_space<vmem>>, %arg5: memref<1x128xf32, #tpu.memory_space<vmem>>, %arg6: memref<8x128xf32, #tpu.memory_space<vmem>>, %arg7: memref<8x128xf32, #tpu.memory_space<vmem>>) attributes {dimension_semantics = [#tpu.dimension_semantics<parallel>], iteration_bounds = array<i64: 1>, scalar_prefetch = 0 : i64, scratch_operands = 0 : i64, tpu.core_type = #tpu.core_type<tc>, window_params = [{transform_indices = @transform_0, window_bounds = array<i64: 8, 128>}, {pipeline_mode = #tpu.pipeline_mode<synchronous>, transform_indices = @transform_1, window_bounds = array<i64: 128, 128>}, {pipeline_mode = #tpu.pipeline_mode<synchronous>, transform_indices = @transform_2, window_bounds = array<i64: 1, 128>}, {pipeline_mode = #tpu.pipeline_mode<synchronous>, transform_indices = @transform_3, window_bounds = array<i64: 128, 128>}, {pipeline_mode = #tpu.pipeline_mode<synchronous>, transform_indices = @transform_4, window_bounds = array<i64: 1, 128>}, {transform_indices = @transform_5, window_bounds = array<i64: 8, 128>}, {transform_indices = @transform_6, window_bounds = array<i64: 8, 128>}]} {
    %c0 = arith.constant 0 : index
    %c0_0 = arith.constant 0 : index
    %0 = vector.load %arg1[%c0, %c0_0] : memref<8x128xbf16, #tpu.memory_space<vmem>>, vector<8x128xbf16>
    %c0_1 = arith.constant 0 : index
    %c0_2 = arith.constant 0 : index
    %1 = vector.load %arg2[%c0_1, %c0_2] : memref<128x128xbf16, #tpu.memory_space<vmem>>, vector<128x128xbf16>
    %cst = arith.constant dense<0.000000e+00> : vector<8x128xf32>
    %2 = tpu.matmul %0, %1, %cst {dimension_numbers = #tpu.dot_dimension_numbers<[1], [0], [0], [1], [0, 0, 1, 1], [], []>} : vector<8x128xbf16>, vector<128x128xbf16>, vector<8x128xf32> -> vector<8x128xf32>
    %c0_3 = arith.constant 0 : index
    %c0_4 = arith.constant 0 : index
    %3 = vector.load %arg3[%c0_3, %c0_4] : memref<1x128xf32, #tpu.memory_space<vmem>>, vector<1x128xf32>
    %4 = vector.broadcast %3 : vector<1x128xf32> to vector<8x128xf32>
    %5 = arith.addf %2, %4 : vector<8x128xf32>
    %cst_5 = arith.constant 0.000000e+00 : f32
    %6 = vector.broadcast %cst_5 : f32 to vector<8x128xf32>
    %7 = arith.maximumf %5, %6 : vector<8x128xf32>
    %c0_6 = arith.constant 0 : index
    %c0_7 = arith.constant 0 : index
    %8 = vector.load %arg7[%c0_6, %c0_7] : memref<8x128xf32, #tpu.memory_space<vmem>>, vector<8x128xf32>
    tpu.vector_store %arg7[%c0_6, %c0_7], %7 {strides = array<i32>} : memref<8x128xf32, #tpu.memory_space<vmem>>, vector<8x128xf32>,
    %9 = arith.truncf %7 : vector<8x128xf32> to vector<8x128xbf16>
    %c0_8 = arith.constant 0 : index
    %c0_9 = arith.constant 0 : index
    %10 = vector.load %arg4[%c0_8, %c0_9] : memref<128x128xbf16, #tpu.memory_space<vmem>>, vector<128x128xbf16>
    %cst_10 = arith.constant dense<0.000000e+00> : vector<8x128xf32>
    %11 = tpu.matmul %9, %10, %cst_10 {dimension_numbers = #tpu.dot_dimension_numbers<[1], [0], [0], [1], [0, 0, 1, 1], [], []>} : vector<8x128xbf16>, vector<128x128xbf16>, vector<8x128xf32> -> vector<8x128xf32>
    %c0_11 = arith.constant 0 : index
    %c0_12 = arith.constant 0 : index
    %12 = vector.load %arg5[%c0_11, %c0_12] : memref<1x128xf32, #tpu.memory_space<vmem>>, vector<1x128xf32>
    %13 = vector.broadcast %12 : vector<1x128xf32> to vector<8x128xf32>
    %14 = arith.addf %11, %13 : vector<8x128xf32>
    %c0_13 = arith.constant 0 : index
    %c0_14 = arith.constant 0 : index
    %15 = vector.load %arg6[%c0_13, %c0_14] : memref<8x128xf32, #tpu.memory_space<vmem>>, vector<8x128xf32>
    tpu.vector_store %arg6[%c0_13, %c0_14], %14 {strides = array<i32>} : memref<8x128xf32, #tpu.memory_space<vmem>>, vector<8x128xf32>,
    return
  }
  func.func @transform_0(%arg0: i32) -> (i32, i32) {
    %c0_i32 = arith.constant 0 : i32
    %c0_i32_0 = arith.constant 0 : i32
    return %arg0, %c0_i32 : i32, i32
  }
  func.func @transform_1(%arg0: i32) -> (i32, i32) {
    %c0_i32 = arith.constant 0 : i32
    %c0_i32_0 = arith.constant 0 : i32
    %c0_i32_1 = arith.constant 0 : i32
    return %c0_i32, %c0_i32_0 : i32, i32
  }
  func.func @transform_2(%arg0: i32) -> (i32, i32) {
    %c0_i32 = arith.constant 0 : i32
    %c0_i32_0 = arith.constant 0 : i32
    %c0_i32_1 = arith.constant 0 : i32
    return %c0_i32, %c0_i32_0 : i32, i32
  }
  func.func @transform_3(%arg0: i32) -> (i32, i32) {
    %c0_i32 = arith.constant 0 : i32
    %c0_i32_0 = arith.constant 0 : i32
    %c0_i32_1 = arith.constant 0 : i32
    return %c0_i32, %c0_i32_0 : i32, i32
  }
  func.func @transform_4(%arg0: i32) -> (i32, i32) {
    %c0_i32 = arith.constant 0 : i32
    %c0_i32_0 = arith.constant 0 : i32
    %c0_i32_1 = arith.constant 0 : i32
    return %c0_i32, %c0_i32_0 : i32, i32
  }
  func.func @transform_5(%arg0: i32) -> (i32, i32) {
    %c0_i32 = arith.constant 0 : i32
    %c0_i32_0 = arith.constant 0 : i32
    return %arg0, %c0_i32 : i32, i32
  }
  func.func @transform_6(%arg0: i32) -> (i32, i32) {
    %c0_i32 = arith.constant 0 : i32
    %c0_i32_0 = arith.constant 0 : i32
    return %arg0, %c0_i32 : i32, i32
  }
}

</mosaic_0001>

<llo_original>
// kernel: tpu_custom_call.1
$region0: #{tpu_custom_call.1}
  #allocation0 [shape = 'u32[]', space=smem, size = 0x4, offset = 0x4, fixed_abs, tag = 'smem constant byte address 0x4 - core index']
  #allocation1 [shape = 'u32[72,128]{1,0:T(1,128)}', space=vmem, size = 0x9000, scoped, tag = 'internal scratch']
  %s0 = inlined_call_operand.hbm [shape: bf16[8,128], index: 0, kind: input, shape index: {}]
  %s1 = inlined_call_operand.hbm [shape: bf16[128,128], index: 1, kind: input, shape index: {}]
  %s2 = inlined_call_operand.vmem [shape: f32[1,128], index: 2, kind: input, shape index: {}]
  %s3 = inlined_call_operand.hbm [shape: bf16[128,128], index: 3, kind: input, shape index: {}]
  %s4 = inlined_call_operand.vmem [shape: f32[1,128], index: 4, kind: input, shape index: {}]
  %s5 = inlined_call_operand.hbm [shape: f32[8,128], index: 5, kind: output, shape index: {0}]
  %s6 = inlined_call_operand.hbm [shape: f32[8,128], index: 6, kind: output, shape index: {1}]
  %7 = xla_tuple %s5, %s6
  %s8 = sld [smem:[#allocation0]]
  $region50: #{tpu_custom_call.1} parent=0
    _
  %s10 = ssub.s32 1, %s8
  %s11 = scalar_select 0, %s10, %s8
  $region1: #{tpu_custom_call.1} parent=0
    #allocation2 [shape = 'u8[2048]{0}', space=vmem, size = 0x800, scoped, tag = 'input window, operand 0, single buffered']
    #allocation3 [shape = 's32[1]{0}', space=sflag, size = 0x4, scoped, tag = 'scoped memory for tpu_custom_call.1']
    #allocation4 [shape = 's32[1]{0}', space=sflag, size = 0x4, scoped, tag = 'scoped memory for tpu_custom_call.1']
    #allocation5 [shape = 'u8[32768]{0}', space=vmem, size = 0x8000, scoped, tag = 'input window, operand 1, single buffered']
    #allocation6 [shape = 's32[1]{0}', space=sflag, size = 0x4, scoped, tag = 'scoped memory for tpu_custom_call.1']
    #allocation7 [shape = 'u8[32768]{0}', space=vmem, size = 0x8000, scoped, tag = 'input window, operand 3, single buffered']
    #allocation8 [shape = 'u8[4096]{0}', space=vmem, size = 0x1000, scoped, tag = 'output window, operand 0, single buffered']
    #allocation9 [shape = 'u8[4096]{0}', space=vmem, size = 0x1000, scoped, tag = 'output window, operand 1, single buffered']
    #allocation10 [shape = 's32[1]{0}', space=sflag, size = 0x4, scoped, tag = 'scoped memory for tpu_custom_call.1']
    %12 = vsyncpa [#allocation3], 0
    %13 = vsyncpa [#allocation6], 0
    %14 = vsyncpa [#allocation4], 0
    %15 = vsyncpa [#allocation10], 0
    // Predicated region
    $region2: #{tpu_custom_call.1} parent=1 // pred_check
      _
    $region3: #{tpu_custom_call.1} parent=1 // pred_check_branch
      %17 = sbr.rel (0) target = $region5
    $region4: #{tpu_custom_call.1} parent=1 // pred_region
      %19 = vsyncadd [#allocation3], 0
      %s21 = sshll.u32 %s0, 4
      %s22 = int_to_ptr.hbm [resolvable:$true] %s21
      %s23 = sshll.u32 [#allocation2], 4
      %s24 = int_to_ptr.vmem [resolvable:$true] %s23
      %26 = dma.hbm_to_vmem [thread:$0]  %s22, 64, %s24, [#allocation3]
    $region5: #{tpu_custom_call.1} parent=1 // pred_fallthru
      _
    // Predicated region
    $region6: #{tpu_custom_call.1} parent=1 // pred_check
      _
    $region7: #{tpu_custom_call.1} parent=1 // pred_check_branch
      %28 = sbr.rel (0) target = $region9
    $region8: #{tpu_custom_call.1} parent=1 // pred_region
      %30 = vsyncadd [#allocation6], 0
      %s31 = sshll.u32 %s1, 4
      %s32 = int_to_ptr.hbm [resolvable:$true] %s31
      %s33 = sshll.u32 [#allocation5], 4
      %s34 = int_to_ptr.vmem [resolvable:$true] %s33
      %39 = dma.hbm_to_vmem [thread:$0]  %s32, 1024, %s34, [#allocation6], 64, 64, 4
    $region9: #{tpu_custom_call.1} parent=1 // pred_fallthru
      _
    // Predicated region
    $region10: #{tpu_custom_call.1} parent=1 // pred_check
      _
    $region11: #{tpu_custom_call.1} parent=1 // pred_check_branch
      %41 = sbr.rel (0) target = $region13
    $region12: #{tpu_custom_call.1} parent=1 // pred_region
      _
    $region13: #{tpu_custom_call.1} parent=1 // pred_fallthru
      _
    // Predicated region
    $region14: #{tpu_custom_call.1} parent=1 // pred_check
      _
    $region15: #{tpu_custom_call.1} parent=1 // pred_check_branch
      %43 = sbr.rel (0) target = $region17
    $region16: #{tpu_custom_call.1} parent=1 // pred_region
      %45 = vsyncadd [#allocation6], 0
      %s46 = sshll.u32 %s3, 4
      %s47 = int_to_ptr.hbm [resolvable:$true] %s46
      %s48 = sshll.u32 [#allocation7], 4
      %s49 = int_to_ptr.vmem [resolvable:$true] %s48
      %54 = dma.hbm_to_vmem [thread:$0]  %s47, 1024, %s49, [#allocation6], 64, 64, 4
    $region17: #{tpu_custom_call.1} parent=1 // pred_fallthru
      _
    // Predicated region
    $region18: #{tpu_custom_call.1} parent=1 // pred_check
      _
    $region19: #{tpu_custom_call.1} parent=1 // pred_check_branch
      %56 = sbr.rel (0) target = $region21
    $region20: #{tpu_custom_call.1} parent=1 // pred_region
      _
    $region21: #{tpu_custom_call.1} parent=1 // pred_fallthru
      _
    // Predicated region
    $region22: #{tpu_custom_call.1} parent=1 // pred_check
      _
    $region23: #{tpu_custom_call.1} parent=1 // pred_check_branch
      %58 = sbr.rel (0) target = $region25
    $region24: #{tpu_custom_call.1} parent=1 // pred_region
      %60 = dma.done [#allocation3], 64
    $region25: #{tpu_custom_call.1} parent=1 // pred_fallthru
      _
    // Predicated region
    $region26: #{tpu_custom_call.1} parent=1 // pred_check
      _
    $region27: #{tpu_custom_call.1} parent=1 // pred_check_branch
      %62 = sbr.rel (0) target = $region29
    $region28: #{tpu_custom_call.1} parent=1 // pred_region
      %64 = dma.done [#allocation6], 1024
    $region29: #{tpu_custom_call.1} parent=1 // pred_fallthru
      _
    // Predicated region
    $region30: #{tpu_custom_call.1} parent=1 // pred_check
      _
    $region31: #{tpu_custom_call.1} parent=1 // pred_check_branch
      %66 = sbr.rel (0) target = $region33
    $region32: #{tpu_custom_call.1} parent=1 // pred_region
      %68 = dma.done [#allocation6], 1024
    $region33: #{tpu_custom_call.1} parent=1 // pred_fallthru
      _
    %v69 = vld [vmem:[#allocation2] sm:$0xf]
    %v70 = vld [vmem:[#allocation5] sm:$0xf]
    %v71 = vld [vmem:[#allocation5 + $0x4] sm:$0xf]
    %v72 = vld [vmem:[#allocation5 + $0x8] sm:$0xf]
    %v73 = vld [vmem:[#allocation5 + $0xc] sm:$0xf]
    %v74 = vld [vmem:[#allocation5 + $0x10] sm:$0xf]
    %v75 = vld [vmem:[#allocation5 + $0x14] sm:$0xf]
    %v76 = vld [vmem:[#allocation5 + $0x18] sm:$0xf]
    %v77 = vld [vmem:[#allocation5 + $0x1c] sm:$0xf]
    %v78 = vld [vmem:[#allocation5 + $0x20] sm:$0xf]
    %v79 = vld [vmem:[#allocation5 + $0x24] sm:$0xf]
    %v80 = vld [vmem:[#allocation5 + $0x28] sm:$0xf]
    %v81 = vld [vmem:[#allocation5 + $0x2c] sm:$0xf]
    %v82 = vld [vmem:[#allocation5 + $0x30] sm:$0xf]
    %v83 = vld [vmem:[#allocation5 + $0x34] sm:$0xf]
    %v84 = vld [vmem:[#allocation5 + $0x38] sm:$0xf]
    %v85 = vld [vmem:[#allocation5 + $0x3c] sm:$0xf]
    %v86 = vld [vmem:[%s2] sm:$0x1]
    %v88 = vperm.slane %v86, 0
    %v106 = vunpack.c.l.b16 %v70
    %v107 = vunpack.c.l.b16 %v71
    %v108 = vunpack.c.l.b16 %v72
    %v109 = vunpack.c.l.b16 %v73
    %v110 = vunpack.c.l.b16 %v74
    %v111 = vunpack.c.l.b16 %v75
    %v112 = vunpack.c.l.b16 %v76
    %v113 = vunpack.c.l.b16 %v77
    %v114 = vunpack.c.l.b16 %v78
    %v115 = vunpack.c.l.b16 %v79
    %v116 = vunpack.c.l.b16 %v80
    %v117 = vunpack.c.l.b16 %v81
    %v118 = vunpack.c.l.b16 %v82
    %v119 = vunpack.c.l.b16 %v83
    %v120 = vunpack.c.l.b16 %v84
    %v121 = vunpack.c.l.b16 %v85
    %v122 = vpack.c.b16 %v107, %v106
    %v123 = vpack.c.b16 %v109, %v108
    %v124 = vpack.c.b16 %v111, %v110
    %v125 = vpack.c.b16 %v113, %v112
    %v126 = vpack.c.b16 %v115, %v114
    %v127 = vpack.c.b16 %v117, %v116
    %v128 = vpack.c.b16 %v119, %v118
    %v129 = vpack.c.b16 %v121, %v120
    %138 = vmatpush.bf16.msra.mxu0 %v129
    %139 = vmatpush.bf16.msra.mxu0 %v128
    %140 = vmatpush.bf16.msra.mxu0 %v127
    %141 = vmatpush.bf16.msra.mxu0 %v126
    %142 = vmatpush.bf16.msra.mxu0 %v125
    %143 = vmatpush.bf16.msra.mxu0 %v124
    %144 = vmatpush.bf16.msra.mxu0 %v123
    %145 = vmatpush.bf16.msra.mxu0 %v122
    %146 = vmatmul.bf16.gmra.mxu0 %v69
    %v147 = vpop.f32.mrf.mxu0
    %v148 = vadd.f32 %v88, %v147
    %v149 = vpop.f32.mrf.mxu0
    %150 = vdwg.mxu0
    %v151 = vmax.f32 %v148, 0.0
    %152 = vst [vmem:[#allocation9] sm:$0xff] %v151
    %v153 = vpack.c.bf16 %v151, %v151
    %v154 = vld [vmem:[#allocation7] sm:$0xf]
    %v155 = vld [vmem:[#allocation7 + $0x4] sm:$0xf]
    %v156 = vld [vmem:[#allocation7 + $0x8] sm:$0xf]
    %v157 = vld [vmem:[#allocation7 + $0xc] sm:$0xf]
    %v158 = vld [vmem:[#allocation7 + $0x10] sm:$0xf]
    %v159 = vld [vmem:[#allocation7 + $0x14] sm:$0xf]
    %v160 = vld [vmem:[#allocation7 + $0x18] sm:$0xf]
    %v161 = vld [vmem:[#allocation7 + $0x1c] sm:$0xf]
    %v162 = vld [vmem:[#allocation7 + $0x20] sm:$0xf]
    %v163 = vld [vmem:[#allocation7 + $0x24] sm:$0xf]
    %v164 = vld [vmem:[#allocation7 + $0x28] sm:$0xf]
    %v165 = vld [vmem:[#allocation7 + $0x2c] sm:$0xf]
    %v166 = vld [vmem:[#allocation7 + $0x30] sm:$0xf]
    %v167 = vld [vmem:[#allocation7 + $0x34] sm:$0xf]
    %v168 = vld [vmem:[#allocation7 + $0x38] sm:$0xf]
    %v169 = vld [vmem:[#allocation7 + $0x3c] sm:$0xf]
    %v170 = vld [vmem:[%s4] sm:$0x1]
    %v172 = vperm.slane %v170, 0
    %v190 = vunpack.c.l.b16 %v154
    %v191 = vunpack.c.l.b16 %v155
    %v192 = vunpack.c.l.b16 %v156
    %v193 = vunpack.c.l.b16 %v157
    %v194 = vunpack.c.l.b16 %v158
    %v195 = vunpack.c.l.b16 %v159
    %v196 = vunpack.c.l.b16 %v160
    %v197 = vunpack.c.l.b16 %v161
    %v198 = vunpack.c.l.b16 %v162
    %v199 = vunpack.c.l.b16 %v163
    %v200 = vunpack.c.l.b16 %v164
    %v201 = vunpack.c.l.b16 %v165
    %v202 = vunpack.c.l.b16 %v166
    %v203 = vunpack.c.l.b16 %v167
    %v204 = vunpack.c.l.b16 %v168
    %v205 = vunpack.c.l.b16 %v169
    %v206 = vpack.c.b16 %v191, %v190
    %v207 = vpack.c.b16 %v193, %v192
    %v208 = vpack.c.b16 %v195, %v194
    %v209 = vpack.c.b16 %v197, %v196
    %v210 = vpack.c.b16 %v199, %v198
    %v211 = vpack.c.b16 %v201, %v200
    %v212 = vpack.c.b16 %v203, %v202
    %v213 = vpack.c.b16 %v205, %v204
    %222 = vmatpush.bf16.msra.mxu0 %v213
    %223 = vmatpush.bf16.msra.mxu0 %v212
    %224 = vmatpush.bf16.msra.mxu0 %v211
    %225 = vmatpush.bf16.msra.mxu0 %v210
    %226 = vmatpush.bf16.msra.mxu0 %v209
    %227 = vmatpush.bf16.msra.mxu0 %v208
    %228 = vmatpush.bf16.msra.mxu0 %v207
    %229 = vmatpush.bf16.msra.mxu0 %v206
    %230 = vmatmul.bf16.gmra.mxu0 %v153
    %v231 = vpop.f32.mrf.mxu0
    %v232 = vadd.f32 %v172, %v231
    %v233 = vpop.f32.mrf.mxu0
    %234 = vdwg.mxu0
    %235 = vst [vmem:[#allocation8] sm:$0xff] %v232
    // Predicated region
    $region34: #{tpu_custom_call.1} parent=1 // pred_check
      _
    $region35: #{tpu_custom_call.1} parent=1 // pred_check_branch
      %237 = sbr.rel (0) target = $region37
    $region36: #{tpu_custom_call.1} parent=1 // pred_region
      %239 = vsyncadd [#allocation4], 0
      %s241 = sshll.u32 [#allocation8], 4
      %s242 = int_to_ptr.vmem [resolvable:$true] %s241
      %s243 = sshll.u32 %s5, 4
      %s244 = int_to_ptr.hbm [resolvable:$true] %s243
      %246 = dma.vmem_to_hbm [thread:$0]  %s242, 128, %s244, [#allocation4]
    $region37: #{tpu_custom_call.1} parent=1 // pred_fallthru
      _
    // Predicated region
    $region38: #{tpu_custom_call.1} parent=1 // pred_check
      _
    $region39: #{tpu_custom_call.1} parent=1 // pred_check_branch
      %248 = sbr.rel (0) target = $region41
    $region40: #{tpu_custom_call.1} parent=1 // pred_region
      %250 = vsyncadd [#allocation10], 0
      %s252 = sshll.u32 [#allocation9], 4
      %s253 = int_to_ptr.vmem [resolvable:$true] %s252
      %s254 = sshll.u32 %s6, 4
      %s255 = int_to_ptr.hbm [resolvable:$true] %s254
      %257 = dma.vmem_to_hbm [thread:$0]  %s253, 128, %s255, [#allocation10]
    $region41: #{tpu_custom_call.1} parent=1 // pred_fallthru
      _
    // Predicated region
    $region42: #{tpu_custom_call.1} parent=1 // pred_check
      _
    $region43: #{tpu_custom_call.1} parent=1 // pred_check_branch
      %259 = sbr.rel (0) target = $region45
    $region44: #{tpu_custom_call.1} parent=1 // pred_region
      %261 = dma.done [#allocation4], 128
    $region45: #{tpu_custom_call.1} parent=1 // pred_fallthru
      _
    // Predicated region
    $region46: #{tpu_custom_call.1} parent=1 // pred_check
      _
    $region47: #{tpu_custom_call.1} parent=1 // pred_check_branch
      %263 = sbr.rel (0) target = $region49
    $region48: #{tpu_custom_call.1} parent=1 // pred_region
      %265 = dma.done [#allocation10], 128
    $region49: #{tpu_custom_call.1} parent=1 // pred_fallthru
      _
    %266 = vsyncpa [#allocation3], 1
    %267 = vsyncpa [#allocation6], 1
    %268 = vsyncpa [#allocation4], 1
    %269 = vsyncpa [#allocation10], 1

// kernel: tpu_custom_call.1
$region0: #{tpu_custom_call.1}
  #allocation0 [shape = 'u32[]', space=smem, size = 0x4, offset = 0x4, fixed_abs, tag = 'smem constant byte address 0x4 - core index']
  #allocation1 [shape = 'u32[72,128]{1,0:T(1,128)}', space=vmem, size = 0x9000, scoped, tag = 'internal scratch']
  %s0 = inlined_call_operand.hbm [shape: bf16[8,128], index: 0, kind: input, shape index: {}]
  %s1 = inlined_call_operand.hbm [shape: bf16[128,128], index: 1, kind: input, shape index: {}]
  %s2 = inlined_call_operand.vmem [shape: f32[1,128], index: 2, kind: input, shape index: {}]
  %s3 = inlined_call_operand.hbm [shape: bf16[128,128], index: 3, kind: input, shape index: {}]
  %s4 = inlined_call_operand.vmem [shape: f32[1,128], index: 4, kind: input, shape index: {}]
  %s5 = inlined_call_operand.hbm [shape: f32[8,128], index: 5, kind: output, shape index: {0}]
  %s6 = inlined_call_operand.hbm [shape: f32[8,128], index: 6, kind: output, shape index: {1}]
  %7 = xla_tuple %s5, %s6
  %s8 = sld [smem:[#allocation0]]
  $region50: #{tpu_custom_call.1} parent=0
    _
  %s10 = ssub.s32 1, %s8
  %s11 = scalar_select 0, %s10, %s8
  $region1: #{tpu_custom_call.1} parent=0
    #allocation2 [shape = 'u8[2048]{0}', space=vmem, size = 0x800, scoped, tag = 'input window, operand 0, single buffered']
    #allocation3 [shape = 's32[1]{0}', space=sflag, size = 0x4, scoped, tag = 'scoped memory for tpu_custom_call.1']
    #allocation4 [shape = 's32[1]{0}', space=sflag, size = 0x4, scoped, tag = 'scoped memory for tpu_custom_call.1']
    #allocation5 [shape = 'u8[32768]{0}', space=vmem, size = 0x8000, scoped, tag = 'input window, operand 1, single buffered']
    #allocation6 [shape = 's32[1]{0}', space=sflag, size = 0x4, scoped, tag = 'scoped memory for tpu_custom_call.1']
    #allocation7 [shape = 'u8[32768]{0}', space=vmem, size = 0x8000, scoped, tag = 'input window, operand 3, single buffered']
    #allocation8 [shape = 'u8[4096]{0}', space=vmem, size = 0x1000, scoped, tag = 'output window, operand 0, single buffered']
    #allocation9 [shape = 'u8[4096]{0}', space=vmem, size = 0x1000, scoped, tag = 'output window, operand 1, single buffered']
    #allocation10 [shape = 's32[1]{0}', space=sflag, size = 0x4, scoped, tag = 'scoped memory for tpu_custom_call.1']
    %12 = vsyncpa [#allocation3], 0
    %13 = vsyncpa [#allocation6], 0
    %14 = vsyncpa [#allocation4], 0
    %15 = vsyncpa [#allocation10], 0
    // Predicated region
    $region2: #{tpu_custom_call.1} parent=1 // pred_check
      _
    $region3: #{tpu_custom_call.1} parent=1 // pred_check_branch
      %17 = sbr.rel (0) target = $region5
    $region4: #{tpu_custom_call.1} parent=1 // pred_region
      %19 = vsyncadd [#allocation3], 0
      %s21 = sshll.u32 %s0, 4
      %s22 = int_to_ptr.hbm [resolvable:$true] %s21
      %s23 = sshll.u32 [#allocation2], 4
      %s24 = int_to_ptr.vmem [resolvable:$true] %s23
      %26 = dma.hbm_to_vmem [thread:$0]  %s22, 64, %s24, [#allocation3]
    $region5: #{tpu_custom_call.1} parent=1 // pred_fallthru
      _
    // Predicated region
    $region6: #{tpu_custom_call.1} parent=1 // pred_check
      _
    $region7: #{tpu_custom_call.1} parent=1 // pred_check_branch
      %28 = sbr.rel (0) target = $region9
    $region8: #{tpu_custom_call.1} parent=1 // pred_region
      %30 = vsyncadd [#allocation6], 0
      %s31 = sshll.u32 %s1, 4
      %s32 = int_to_ptr.hbm [resolvable:$true] %s31
      %s33 = sshll.u32 [#allocation5], 4
      %s34 = int_to_ptr.vmem [resolvable:$true] %s33
      %39 = dma.hbm_to_vmem [thread:$0]  %s32, 1024, %s34, [#allocation6], 64, 64, 4
    $region9: #{tpu_custom_call.1} parent=1 // pred_fallthru
      _
    // Predicated region
    $region10: #{tpu_custom_call.1} parent=1 // pred_check
      _
    $region11: #{tpu_custom_call.1} parent=1 // pred_check_branch
      %41 = sbr.rel (0) target = $region13
    $region12: #{tpu_custom_call.1} parent=1 // pred_region
      _
    $region13: #{tpu_custom_call.1} parent=1 // pred_fallthru
      _
    // Predicated region
    $region14: #{tpu_custom_call.1} parent=1 // pred_check
      _
    $region15: #{tpu_custom_call.1} parent=1 // pred_check_branch
      %43 = sbr.rel (0) target = $region17
    $region16: #{tpu_custom_call.1} parent=1 // pred_region
      %45 = vsyncadd [#allocation6], 0
      %s46 = sshll.u32 %s3, 4
      %s47 = int_to_ptr.hbm [resolvable:$true] %s46
      %s48 = sshll.u32 [#allocation7], 4
      %s49 = int_to_ptr.vmem [resolvable:$true] %s48
      %54 = dma.hbm_to_vmem [thread:$0]  %s47, 1024, %s49, [#allocation6], 64, 64, 4
    $region17: #{tpu_custom_call.1} parent=1 // pred_fallthru
      _
    // Predicated region
    $region18: #{tpu_custom_call.1} parent=1 // pred_check
      _
    $region19: #{tpu_custom_call.1} parent=1 // pred_check_branch
      %56 = sbr.rel (0) target = $region21
    $region20: #{tpu_custom_call.1} parent=1 // pred_region
      _
    $region21: #{tpu_custom_call.1} parent=1 // pred_fallthru
      _
    // Predicated region
    $region22: #{tpu_custom_call.1} parent=1 // pred_check
      _
    $region23: #{tpu_custom_call.1} parent=1 // pred_check_branch
      %58 = sbr.rel (0) target = $region25
    $region24: #{tpu_custom_call.1} parent=1 // pred_region
      %60 = dma.done [#allocation3], 64
    $region25: #{tpu_custom_call.1} parent=1 // pred_fallthru
      _
    // Predicated region
    $region26: #{tpu_custom_call.1} parent=1 // pred_check
      _
    $region27: #{tpu_custom_call.1} parent=1 // pred_check_branch
      %62 = sbr.rel (0) target = $region29
    $region28: #{tpu_custom_call.1} parent=1 // pred_region
      %64 = dma.done [#allocation6], 1024
    $region29: #{tpu_custom_call.1} parent=1 // pred_fallthru
      _
    // Predicated region
    $region30: #{tpu_custom_call.1} parent=1 // pred_check
      _
    $region31: #{tpu_custom_call.1} parent=1 // pred_check_branch
      %66 = sbr.rel (0) target = $region33
    $region32: #{tpu_custom_call.1} parent=1 // pred_region
      %68 = dma.done [#allocation6], 1024
    $region33: #{tpu_custom_call.1} parent=1 // pred_fallthru
      _
    %v69 = vld [vmem:[#allocation2] sm:$0xf]
    %v70 = vld [vmem:[#allocation5] sm:$0xf]
    %v71 = vld [vmem:[#allocation5 + $0x4] sm:$0xf]
    %v72 = vld [vmem:[#allocation5 + $0x8] sm:$0xf]
    %v73 = vld [vmem:[#allocation5 + $0xc] sm:$0xf]
    %v74 = vld [vmem:[#allocation5 + $0x10] sm:$0xf]
    %v75 = vld [vmem:[#allocation5 + $0x14] sm:$0xf]
    %v76 = vld [vmem:[#allocation5 + $0x18] sm:$0xf]
    %v77 = vld [vmem:[#allocation5 + $0x1c] sm:$0xf]
    %v78 = vld [vmem:[#allocation5 + $0x20] sm:$0xf]
    %v79 = vld [vmem:[#allocation5 + $0x24] sm:$0xf]
    %v80 = vld [vmem:[#allocation5 + $0x28] sm:$0xf]
    %v81 = vld [vmem:[#allocation5 + $0x2c] sm:$0xf]
    %v82 = vld [vmem:[#allocation5 + $0x30] sm:$0xf]
    %v83 = vld [vmem:[#allocation5 + $0x34] sm:$0xf]
    %v84 = vld [vmem:[#allocation5 + $0x38] sm:$0xf]
    %v85 = vld [vmem:[#allocation5 + $0x3c] sm:$0xf]
    %v86 = vld [vmem:[%s2] sm:$0x1]
    %v88 = vperm.slane %v86, 0
    %v106 = vunpack.c.l.b16 %v70
    %v107 = vunpack.c.l.b16 %v71
    %v108 = vunpack.c.l.b16 %v72
    %v109 = vunpack.c.l.b16 %v73
    %v110 = vunpack.c.l.b16 %v74
    %v111 = vunpack.c.l.b16 %v75
    %v112 = vunpack.c.l.b16 %v76
    %v113 = vunpack.c.l.b16 %v77
    %v114 = vunpack.c.l.b16 %v78
    %v115 = vunpack.c.l.b16 %v79
    %v116 = vunpack.c.l.b16 %v80
    %v117 = vunpack.c.l.b16 %v81
    %v118 = vunpack.c.l.b16 %v82
    %v119 = vunpack.c.l.b16 %v83
    %v120 = vunpack.c.l.b16 %v84
    %v121 = vunpack.c.l.b16 %v85
    %v122 = vpack.c.b16 %v107, %v106
    %v123 = vpack.c.b16 %v109, %v108
    %v124 = vpack.c.b16 %v111, %v110
    %v125 = vpack.c.b16 %v113, %v112
    %v126 = vpack.c.b16 %v115, %v114
    %v127 = vpack.c.b16 %v117, %v116
    %v128 = vpack.c.b16 %v119, %v118
    %v129 = vpack.c.b16 %v121, %v120
    %138 = vmatpush.bf16.msra.mxu0 %v129
    %139 = vmatpush.bf16.msra.mxu0 %v128
    %140 = vmatpush.bf16.msra.mxu0 %v127
    %141 = vmatpush.bf16.msra.mxu0 %v126
    %142 = vmatpush.bf16.msra.mxu0 %v125
    %143 = vmatpush.bf16.msra.mxu0 %v124
    %144 = vmatpush.bf16.msra.mxu0 %v123
    %145 = vmatpush.bf16.msra.mxu0 %v122
    %146 = vmatmul.bf16.gmra.mxu0 %v69
    %v147 = vpop.f32.mrf.mxu0
    %v148 = vadd.f32 %v88, %v147
    %v149 = vpop.f32.mrf.mxu0
    %150 = vdwg.mxu0
    %v151 = vmax.f32 %v148, 0.0
    %152 = vst [vmem:[#allocation9] sm:$0xff] %v151
    %v153 = vpack.c.bf16 %v151, %v151
    %v154 = vld [vmem:[#allocation7] sm:$0xf]
    %v155 = vld [vmem:[#allocation7 + $0x4] sm:$0xf]
    %v156 = vld [vmem:[#allocation7 + $0x8] sm:$0xf]
    %v157 = vld [vmem:[#allocation7 + $0xc] sm:$0xf]
    %v158 = vld [vmem:[#allocation7 + $0x10] sm:$0xf]
    %v159 = vld [vmem:[#allocation7 + $0x14] sm:$0xf]
    %v160 = vld [vmem:[#allocation7 + $0x18] sm:$0xf]
    %v161 = vld [vmem:[#allocation7 + $0x1c] sm:$0xf]
    %v162 = vld [vmem:[#allocation7 + $0x20] sm:$0xf]
    %v163 = vld [vmem:[#allocation7 + $0x24] sm:$0xf]
    %v164 = vld [vmem:[#allocation7 + $0x28] sm:$0xf]
    %v165 = vld [vmem:[#allocation7 + $0x2c] sm:$0xf]
    %v166 = vld [vmem:[#allocation7 + $0x30] sm:$0xf]
    %v167 = vld [vmem:[#allocation7 + $0x34] sm:$0xf]
    %v168 = vld [vmem:[#allocation7 + $0x38] sm:$0xf]
    %v169 = vld [vmem:[#allocation7 + $0x3c] sm:$0xf]
    %v170 = vld [vmem:[%s4] sm:$0x1]
    %v172 = vperm.slane %v170, 0
    %v190 = vunpack.c.l.b16 %v154
    %v191 = vunpack.c.l.b16 %v155
    %v192 = vunpack.c.l.b16 %v156
    %v193 = vunpack.c.l.b16 %v157
    %v194 = vunpack.c.l.b16 %v158
    %v195 = vunpack.c.l.b16 %v159
    %v196 = vunpack.c.l.b16 %v160
    %v197 = vunpack.c.l.b16 %v161
    %v198 = vunpack.c.l.b16 %v162
    %v199 = vunpack.c.l.b16 %v163
    %v200 = vunpack.c.l.b16 %v164
    %v201 = vunpack.c.l.b16 %v165
    %v202 = vunpack.c.l.b16 %v166
    %v203 = vunpack.c.l.b16 %v167
    %v204 = vunpack.c.l.b16 %v168
    %v205 = vunpack.c.l.b16 %v169
    %v206 = vpack.c.b16 %v191, %v190
    %v207 = vpack.c.b16 %v193, %v192
    %v208 = vpack.c.b16 %v195, %v194
    %v209 = vpack.c.b16 %v197, %v196
    %v210 = vpack.c.b16 %v199, %v198
    %v211 = vpack.c.b16 %v201, %v200
    %v212 = vpack.c.b16 %v203, %v202
    %v213 = vpack.c.b16 %v205, %v204
    %222 = vmatpush.bf16.msra.mxu0 %v213
    %223 = vmatpush.bf16.msra.mxu0 %v212
    %224 = vmatpush.bf16.msra.mxu0 %v211
    %225 = vmatpush.bf16.msra.mxu0 %v210
    %226 = vmatpush.bf16.msra.mxu0 %v209
    %227 = vmatpush.bf16.msra.mxu0 %v208
    %228 = vmatpush.bf16.msra.mxu0 %v207
    %229 = vmatpush.bf16.msra.mxu0 %v206
    %230 = vmatmul.bf16.gmra.mxu0 %v153
    %v231 = vpop.f32.mrf.mxu0
    %v232 = vadd.f32 %v172, %v231
    %v233 = vpop.f32.mrf.mxu0
    %234 = vdwg.mxu0
    %235 = vst [vmem:[#allocation8] sm:$0xff] %v232
    // Predicated region
    $region34: #{tpu_custom_call.1} parent=1 // pred_check
      _
    $region35: #{tpu_custom_call.1} parent=1 // pred_check_branch
      %237 = sbr.rel (0) target = $region37
    $region36: #{tpu_custom_call.1} parent=1 // pred_region
      %239 = vsyncadd [#allocation4], 0
      %s241 = sshll.u32 [#allocation8], 4
      %s242 = int_to_ptr.vmem [resolvable:$true] %s241
      %s243 = sshll.u32 %s5, 4
      %s244 = int_to_ptr.hbm [resolvable:$true] %s243
      %246 = dma.vmem_to_hbm [thread:$0]  %s242, 128, %s244, [#allocation4]
    $region37: #{tpu_custom_call.1} parent=1 // pred_fallthru
      _
    // Predicated region
    $region38: #{tpu_custom_call.1} parent=1 // pred_check
      _
    $region39: #{tpu_custom_call.1} parent=1 // pred_check_branch
      %248 = sbr.rel (0) target = $region41
    $region40: #{tpu_custom_call.1} parent=1 // pred_region
      %250 = vsyncadd [#allocation10], 0
      %s252 = sshll.u32 [#allocation9], 4
      %s253 = int_to_ptr.vmem [resolvable:$true] %s252
      %s254 = sshll.u32 %s6, 4
      %s255 = int_to_ptr.hbm [resolvable:$true] %s254
      %257 = dma.vmem_to_hbm [thread:$0]  %s253, 128, %s255, [#allocation10]
    $region41: #{tpu_custom_call.1} parent=1 // pred_fallthru
      _
    // Predicated region
    $region42: #{tpu_custom_call.1} parent=1 // pred_check
      _
    $region43: #{tpu_custom_call.1} parent=1 // pred_check_branch
      %259 = sbr.rel (0) target = $region45
    $region44: #{tpu_custom_call.1} parent=1 // pred_region
      %261 = dma.done [#allocation4], 128
    $region45: #{tpu_custom_call.1} parent=1 // pred_fallthru
      _
    // Predicated region
    $region46: #{tpu_custom_call.1} parent=1 // pred_check
      _
    $region47: #{tpu_custom_call.1} parent=1 // pred_check_branch
      %263 = sbr.rel (0) target = $region49
    $region48: #{tpu_custom_call.1} parent=1 // pred_region
      %265 = dma.done [#allocation10], 128
    $region49: #{tpu_custom_call.1} parent=1 // pred_fallthru
      _
    %266 = vsyncpa [#allocation3], 1
    %267 = vsyncpa [#allocation6], 1
    %268 = vsyncpa [#allocation4], 1
    %269 = vsyncpa [#allocation10], 1

</llo_original>
